<compile_context>
chip_gen: v7x
topology: tpu7x:2x2x1
jax: 0.10.0
libtpu: 0.0.40
codegen_flags: <defaults>
</compile_context>

<pallas_src>
import itertools
from functools import partial

import numpy as np
import jax
import jax.numpy as jnp
from jax import lax
from jax.experimental import pallas as pl
from jax.experimental.pallas import tpu as pltpu


# ---------------------------------------------------------------------------
# Fused sweep kernel: one grid step per sender; all receivers and both losses
# are evaluated inside the step.
# ---------------------------------------------------------------------------
def _sweep_kernel_body(s_ids_ref,                 # scalar prefetch (SMEM)
                       x_ref, tgt_ref,            # (B, D), (B, N_R*O) tiled target
                       ws_ref, bs_ref,            # (1, D, H), (1, 1, H) gathered sender slab
                       wr_ref, br_ref,            # (H, N_R*O), (1, N_R*O) stacked receivers
                       out_ref,                   # (1, R_PAD, 128) lane-dense loss rows
                       *, n_recv, o_dim, r_pad):
    del s_ids_ref  # only used by the BlockSpec index_maps

    # Sender: msg = tanh(x @ Ws[s_i] + bs[s_i])          (MXU + EUP), once per sender
    msg = jnp.tanh(
        jnp.dot(x_ref[...], ws_ref[0], preferred_element_type=jnp.float32)
        + bs_ref[0])

    # All receivers at once: pred = msg @ Wr_stacked + br_stacked   (one wide MXU call)
    pred = (jnp.dot(msg, wr_ref[...], preferred_element_type=jnp.float32)
            + br_ref[...])

    d = pred - tgt_ref[...]
    d2 = d * d
    ad = jnp.abs(d)
    inv = 1.0 / float(d.shape[0] * o_dim)          # static 1/(B*O)

    # Build the (R_PAD, 128) loss block: row r = MSE(receiver r),
    # row n_recv + r = L1(receiver r).  Full-tile unmasked store.
    row_ids = lax.broadcasted_iota(jnp.int32, (r_pad, 128), 0)
    block = jnp.zeros((r_pad, 128), jnp.float32)
    for r in range(n_recv):                         # static unroll, n_recv is small
        lo, hi = r * o_dim, (r + 1) * o_dim
        mse_r = jnp.sum(d2[:, lo:hi]) * inv
        l1_r = jnp.sum(ad[:, lo:hi]) * inv
        block = jnp.where(row_ids == r, mse_r, block)
        block = jnp.where(row_ids == n_recv + r, l1_r, block)
    out_ref[0] = block


@jax.jit
def _run_sender_sweep(x, target, sender_w, sender_b, recv_w, recv_b, sweep_s_ids):
    """One fused pallas_call: grid over senders, all receivers/losses per step.

    Returns (n_senders, R_PAD, 128) f32 where [s, r, :] holds MSE of receiver r
    and [s, n_recv + r, :] holds L1 of receiver r for the s-th sweep sender.
    """
    B, D = x.shape
    O = target.shape[1]
    H = sender_w.shape[2]
    N_R = recv_w.shape[0]
    n_s = sweep_s_ids.shape[0]
    r_pad = max(8, -(-(2 * N_R) // 8) * 8)

    # Constant-per-sweep restructuring of the receiver bank (one wide RHS).
    wr_stacked = jnp.transpose(recv_w, (1, 0, 2)).reshape(H, N_R * O)
    br_stacked = jnp.transpose(recv_b, (1, 0, 2)).reshape(1, N_R * O)
    tgt_tiled = jnp.tile(target, (1, N_R))

    kernel = partial(_sweep_kernel_body, n_recv=N_R, o_dim=O, r_pad=r_pad)

    cost = pl.CostEstimate(
        flops=2 * n_s * B * (D * H + H * N_R * O),
        transcendentals=n_s * B * H,
        bytes_accessed=4 * (B * D + B * N_R * O + n_s * (D * H + H)
                            + H * N_R * O + N_R * O + n_s * r_pad * 128),
    )

    out = pl.pallas_call(
        kernel,
        out_shape=jax.ShapeDtypeStruct((n_s, r_pad, 128), jnp.float32),
        grid_spec=pltpu.PrefetchScalarGridSpec(
            num_scalar_prefetch=1,
            grid=(n_s,),
            in_specs=[
                # Invariant blocks: same block index every step -> no re-DMA.
                pl.BlockSpec((B, D), lambda i, s: (0, 0)),
                pl.BlockSpec((B, N_R * O), lambda i, s: (0, 0)),
                # Sender slab gathered from the stacked bank via scalar prefetch.
                pl.BlockSpec((1, D, H), lambda i, s: (s[i], 0, 0)),
                pl.BlockSpec((1, 1, H), lambda i, s: (s[i], 0, 0)),
                # Stacked receiver bank: one wide RHS, invariant across steps.
                pl.BlockSpec((H, N_R * O), lambda i, s: (0, 0)),
                pl.BlockSpec((1, N_R * O), lambda i, s: (0, 0)),
            ],
            out_specs=pl.BlockSpec((1, r_pad, 128), lambda i, s: (i, 0, 0)),
        ),
        compiler_params=pltpu.CompilerParams(
            dimension_semantics=("parallel",)),   # v7x: split senders over 2 TCs
        cost_estimate=cost,
    )(sweep_s_ids, x, tgt_tiled, sender_w, sender_b, wr_stacked, br_stacked)
    return out


def full_sweep_losses(x, target, sender_w, sender_b, recv_w, recv_b,
                      s_ids, r_ids, l_ids):
    """Per-triple losses for k (sender, receiver, loss) draws.

    Runs one fused pallas_call with grid = unique senders; every receiver and
    both losses are produced per sender step, and the requested triples are
    gathered on the host.  Semantically identical to evaluating each triple.
    """
    n_recv = recv_w.shape[0]
    s_np = np.asarray(s_ids)
    r_np = np.asarray(r_ids)
    l_np = np.asarray(l_ids)
    uniq, pos = np.unique(s_np, return_inverse=True)

    sweep = _run_sender_sweep(x, target, sender_w, sender_b, recv_w, recv_b,
                              jnp.asarray(uniq, jnp.int32))

    rows = np.where(l_np == 0, r_np, n_recv + r_np)
    return sweep[jnp.asarray(pos, jnp.int32), jnp.asarray(rows, jnp.int32), 0]


def evaluate_triple(sender, receiver, loss, x, target):
    """Fused sender→receiver→loss evaluation for a single sampler draw."""
    s = jnp.asarray([sender.idx], jnp.int32)
    r = jnp.asarray([receiver.idx], jnp.int32)
    l = jnp.asarray([loss.loss_code], jnp.int32)
    return full_sweep_losses(x, target, sender.w_bank, sender.b_bank,
                             receiver.w_bank, receiver.b_bank, s, r, l)[0]


# ---------------------------------------------------------------------------
# Stand-alone agent / loss kernels (module-interface parity: the objects the
# sampler hands out are individually callable, like the original nn.Modules).
# For repeated draws prefer next_triples(k) + full_sweep_losses (one dispatch).
# ---------------------------------------------------------------------------
def _linear_tanh_kernel(x_ref, w_ref, b_ref, o_ref):
    h = jnp.dot(x_ref[...], w_ref[...], preferred_element_type=jnp.float32)
    o_ref[...] = jnp.tanh(h + b_ref[...]).astype(o_ref.dtype)


def _linear_kernel(x_ref, w_ref, b_ref, o_ref):
    y = jnp.dot(x_ref[...], w_ref[...], preferred_element_type=jnp.float32)
    o_ref[...] = (y + b_ref[...]).astype(o_ref.dtype)


def _apply_agent(kernel, x, w, b):
    B = x.shape[0]
    Dout = w.shape[1]
    return pl.pallas_call(
        kernel,
        out_shape=jax.ShapeDtypeStruct((B, Dout), jnp.float32),
        in_specs=[pl.BlockSpec(memory_space=pltpu.MemorySpace.VMEM)] * 3,
        out_specs=pl.BlockSpec(memory_space=pltpu.MemorySpace.VMEM),
    )(x, w, b)


def _mse_loss_kernel(p_ref, t_ref, o_ref):
    d = p_ref[...] - t_ref[...]
    o_ref[0, 0] = jnp.sum(d * d) * (1.0 / float(p_ref.shape[0] * p_ref.shape[1]))


def _l1_loss_kernel(p_ref, t_ref, o_ref):
    d = jnp.abs(p_ref[...] - t_ref[...])
    o_ref[0, 0] = jnp.sum(d) * (1.0 / float(p_ref.shape[0] * p_ref.shape[1]))


def _apply_loss(kernel, pred, target):
    out = pl.pallas_call(
        kernel,
        out_shape=jax.ShapeDtypeStruct((1, 1), jnp.float32),
        in_specs=[pl.BlockSpec(memory_space=pltpu.MemorySpace.VMEM),
                  pl.BlockSpec(memory_space=pltpu.MemorySpace.VMEM)],
        out_specs=pl.BlockSpec(memory_space=pltpu.MemorySpace.SMEM),
    )(pred, target)
    return out[0, 0]


class PallasSender:
    def __init__(self, w_bank, b_bank, idx):
        self.w_bank, self.b_bank, self.idx = w_bank, b_bank, idx

    def __call__(self, x):
        return _apply_agent(_linear_tanh_kernel, x,
                            self.w_bank[self.idx], self.b_bank[self.idx])


class PallasReceiver:
    def __init__(self, w_bank, b_bank, idx):
        self.w_bank, self.b_bank, self.idx = w_bank, b_bank, idx

    def __call__(self, message):
        return _apply_agent(_linear_kernel, message,
                            self.w_bank[self.idx], self.b_bank[self.idx])


def mse_loss(pred, target):
    return _apply_loss(_mse_loss_kernel, pred, target)


def l1_loss(pred, target):
    return _apply_loss(_l1_loss_kernel, pred, target)


mse_loss.loss_code = 0
l1_loss.loss_code = 1


# ---------------------------------------------------------------------------
# FullSweepAgentSampler — forward-pass semantics reproduced exactly.
# ---------------------------------------------------------------------------
class FullSweepAgentSampler:
    def __init__(self, senders, receivers, losses):
        self.senders = list(senders)
        self.receivers = list(receivers)
        self.losses = list(losses)
        self.senders_order = list(range(len(self.senders)))
        self.receivers_order = list(range(len(self.receivers)))
        self.losses_order = list(range(len(self.losses)))
        self.reset_order()

    def reset_order(self):
        np.random.shuffle(self.senders_order)
        np.random.shuffle(self.receivers_order)
        np.random.shuffle(self.losses_order)
        self.iterator = itertools.product(
            self.senders_order, self.receivers_order, self.losses_order)

    def _next_indices(self):
        try:
            return next(self.iterator)
        except StopIteration:
            self.reset_order()
            return next(self.iterator)

    def forward(self):
        sender_idx, recv_idx, loss_idx = self._next_indices()
        return (self.senders[sender_idx], self.receivers[recv_idx],
                self.losses[loss_idx])

    __call__ = forward

    def next_triples(self, k):
        """Exactly equivalent to k forward() calls; returns per-triple index
        arrays for the fused single-pallas_call sweep."""
        s_ids, r_ids, l_ids = [], [], []
        for _ in range(k):
            s, r, l = self._next_indices()
            s_ids.append(self.senders[s].idx)
            r_ids.append(self.receivers[r].idx)
            l_ids.append(self.losses[l].loss_code)
        return (jnp.asarray(s_ids, jnp.int32),
                jnp.asarray(r_ids, jnp.int32),
                jnp.asarray(l_ids, jnp.int32))


# ---------------------------------------------------------------------------
# Demo / smoke test
# ---------------------------------------------------------------------------
if __name__ == "__main__":
    np.random.seed(0)  # deterministic sampler shuffles

    # Lane-dense shapes: feature dims sit on the full 128-lane axis.
    # (B=8 keeps the demo small; larger B fills more MXU rows for free.)
    B, D, H, O = 8, 128, 128, 128
    N_SENDERS, N_RECEIVERS = 2, 3

    key = jax.random.PRNGKey(0)
    kx, kt, ksw, ksb, krw, krb = jax.random.split(key, 6)

    x = jax.random.normal(kx, (B, D), dtype=jnp.float32)
    target = jax.random.normal(kt, (B, O), dtype=jnp.float32)

    sender_w = jax.random.normal(ksw, (N_SENDERS, D, H), dtype=jnp.float32) * 0.1
    sender_b = jax.random.normal(ksb, (N_SENDERS, 1, H), dtype=jnp.float32) * 0.1
    recv_w = jax.random.normal(krw, (N_RECEIVERS, H, O), dtype=jnp.float32) * 0.1
    recv_b = jax.random.normal(krb, (N_RECEIVERS, 1, O), dtype=jnp.float32) * 0.1

    senders = [PallasSender(sender_w, sender_b, i) for i in range(N_SENDERS)]
    receivers = [PallasReceiver(recv_w, recv_b, i) for i in range(N_RECEIVERS)]
    losses = [mse_loss, l1_loss]

    sampler = FullSweepAgentSampler(senders, receivers, losses)

    def reference_loss(si, ri, code):
        msg = jnp.tanh(jnp.dot(x, sender_w[si],
                               preferred_element_type=jnp.float32) + sender_b[si, 0])
        pred = jnp.dot(msg, recv_w[ri],
                       preferred_element_type=jnp.float32) + recv_b[ri, 0]
        diff = pred - target
        return jnp.mean(diff * diff) if code == 0 else jnp.mean(jnp.abs(diff))

    ok = True

    # 1) Full cartesian sweep (2*3*2 = 12 triples) as ONE fused pallas_call
    #    with grid = number of unique senders (= 2 steps), synced once.
    n_triples = N_SENDERS * N_RECEIVERS * len(losses)
    s_ids, r_ids, l_ids = sampler.next_triples(n_triples)
    sweep = jax.block_until_ready(
        full_sweep_losses(x, target, sender_w, sender_b, recv_w, recv_b,
                          s_ids, r_ids, l_ids))
    s_np, r_np, l_np = np.asarray(s_ids), np.asarray(r_ids), np.asarray(l_ids)
    for t in range(n_triples):
        ref = reference_loss(int(s_np[t]), int(r_np[t]), int(l_np[t]))
        ok &= bool(np.allclose(float(sweep[t]), float(ref), rtol=1e-3, atol=1e-3))

    # 2) Module-style draws via forward(): individually-callable agents/losses
    #    plus the fused per-draw path.
    for _ in range(3):
        sender, receiver, loss = sampler.forward()
        msg = sender(x)                       # Pallas: tanh(x @ Ws[i] + bs[i])
        pred = receiver(msg)                  # Pallas: msg @ Wr[j] + br[j]
        loss_val = loss(pred, target)         # Pallas: reduction to scalar
        fused_val = evaluate_triple(sender, receiver, loss, x, target)
        jax.block_until_ready((loss_val, fused_val))
        ref = reference_loss(sender.idx, receiver.idx, loss.loss_code)
        ok &= bool(np.allclose(float(loss_val), float(ref), rtol=1e-3, atol=1e-3))
        ok &= bool(np.allclose(float(fused_val), float(ref), rtol=1e-3, atol=1e-3))

    assert ok, "Pallas output mismatched JAX reference"
    print("KERNEL_OK")
</pallas_src>

<mosaic_0001>
module attributes {stable_mosaic.version = 11 : i64} {
  func.func @_sweep_kernel_body(%arg0: i32, %arg1: memref<2xi32, #tpu.memory_space<smem>>, %arg2: memref<8x128xf32, #tpu.memory_space<vmem>>, %arg3: memref<8x384xf32, #tpu.memory_space<vmem>>, %arg4: memref<1x128x128xf32, #tpu.memory_space<vmem>>, %arg5: memref<1x1x128xf32, #tpu.memory_space<vmem>>, %arg6: memref<128x384xf32, #tpu.memory_space<vmem>>, %arg7: memref<1x384xf32, #tpu.memory_space<vmem>>, %arg8: memref<1x8x128xf32, #tpu.memory_space<vmem>>) attributes {dimension_semantics = [#tpu.dimension_semantics<parallel>], iteration_bounds = array<i64: 2>, scalar_prefetch = 1 : i64, scratch_operands = 0 : i64, tpu.core_type = #tpu.core_type<tc>, window_params = [{pipeline_mode = #tpu.pipeline_mode<synchronous>, transform_indices = @transform_0, window_bounds = array<i64: 8, 128>}, {pipeline_mode = #tpu.pipeline_mode<synchronous>, transform_indices = @transform_1, window_bounds = array<i64: 8, 384>}, {transform_indices = @transform_2, window_bounds = array<i64: 1, 128, 128>}, {transform_indices = @transform_3, window_bounds = array<i64: 1, 1, 128>}, {pipeline_mode = #tpu.pipeline_mode<synchronous>, transform_indices = @transform_4, window_bounds = array<i64: 128, 384>}, {pipeline_mode = #tpu.pipeline_mode<synchronous>, transform_indices = @transform_5, window_bounds = array<i64: 1, 384>}, {transform_indices = @transform_6, window_bounds = array<i64: 1, 8, 128>}]} {
    %c0 = arith.constant 0 : index
    %c0_0 = arith.constant 0 : index
    %0 = vector.load %arg2[%c0, %c0_0] : memref<8x128xf32, #tpu.memory_space<vmem>>, vector<8x128xf32>
    %c0_1 = arith.constant 0 : index
    %c0_2 = arith.constant 0 : index
    %c0_3 = arith.constant 0 : index
    %1 = vector.load %arg4[%c0_1, %c0_2, %c0_3] : memref<1x128x128xf32, #tpu.memory_space<vmem>>, vector<1x128x128xf32>
    %2 = vector.shape_cast %1 : vector<1x128x128xf32> to vector<128x128xf32>
    %cst = arith.constant dense<0.000000e+00> : vector<8x128xf32>
    %3 = tpu.matmul %0, %2, %cst {dimension_numbers = #tpu.dot_dimension_numbers<[1], [0], [0], [1], [0, 0, 1, 1], [], []>} : vector<8x128xf32>, vector<128x128xf32>, vector<8x128xf32> -> vector<8x128xf32>
    %c0_4 = arith.constant 0 : index
    %c0_5 = arith.constant 0 : index
    %c0_6 = arith.constant 0 : index
    %4 = vector.load %arg5[%c0_4, %c0_5, %c0_6] : memref<1x1x128xf32, #tpu.memory_space<vmem>>, vector<1x1x128xf32>
    %5 = vector.shape_cast %4 : vector<1x1x128xf32> to vector<1x128xf32>
    %6 = vector.broadcast %5 : vector<1x128xf32> to vector<8x128xf32>
    %7 = arith.addf %3, %6 : vector<8x128xf32>
    %8 = math.tanh %7 : vector<8x128xf32>
    %c0_7 = arith.constant 0 : index
    %c0_8 = arith.constant 0 : index
    %9 = vector.load %arg6[%c0_7, %c0_8] : memref<128x384xf32, #tpu.memory_space<vmem>>, vector<128x384xf32>
    %cst_9 = arith.constant dense<0.000000e+00> : vector<8x384xf32>
    %10 = tpu.matmul %8, %9, %cst_9 {dimension_numbers = #tpu.dot_dimension_numbers<[1], [0], [0], [1], [0, 0, 1, 1], [], []>} : vector<8x128xf32>, vector<128x384xf32>, vector<8x384xf32> -> vector<8x384xf32>
    %c0_10 = arith.constant 0 : index
    %c0_11 = arith.constant 0 : index
    %11 = vector.load %arg7[%c0_10, %c0_11] : memref<1x384xf32, #tpu.memory_space<vmem>>, vector<1x384xf32>
    %12 = vector.broadcast %11 : vector<1x384xf32> to vector<8x384xf32>
    %13 = arith.addf %10, %12 : vector<8x384xf32>
    %c0_12 = arith.constant 0 : index
    %c0_13 = arith.constant 0 : index
    %14 = vector.load %arg3[%c0_12, %c0_13] : memref<8x384xf32, #tpu.memory_space<vmem>>, vector<8x384xf32>
    %15 = arith.subf %13, %14 : vector<8x384xf32>
    %16 = arith.mulf %15, %15 : vector<8x384xf32>
    %17 = math.absf %15 : vector<8x384xf32>
    %18 = tpu.iota {dimensions = array<i32: 0>} : vector<8x128xi32>
    %cst_14 = arith.constant 0.000000e+00 : f32
    %19 = vector.broadcast %cst_14 : f32 to vector<8x128xf32>
    %20 = vector.extract_strided_slice %16 {offsets = [0, 0], sizes = [8, 128], strides = [1, 1]} : vector<8x384xf32> to vector<8x128xf32>
    %21 = vector.shape_cast %20 : vector<8x128xf32> to vector<1x8x128xf32>
    %cst_15 = arith.constant dense<0.000000e+00> : vector<1xf32>
    %22 = vector.multi_reduction <add>, %21, %cst_15 [1, 2] : vector<1x8x128xf32> to vector<1xf32>
    %23 = vector.shape_cast %22 : vector<1xf32> to vector<1x1x1xf32>
    %24 = vector.extract %23[0, 0, 0] : f32 from vector<1x1x1xf32>
    %cst_16 = arith.constant 9.765625E-4 : f32
    %25 = arith.mulf %24, %cst_16 : f32
    %26 = vector.extract_strided_slice %17 {offsets = [0, 0], sizes = [8, 128], strides = [1, 1]} : vector<8x384xf32> to vector<8x128xf32>
    %27 = vector.shape_cast %26 : vector<8x128xf32> to vector<1x8x128xf32>
    %cst_17 = arith.constant dense<0.000000e+00> : vector<1xf32>
    %28 = vector.multi_reduction <add>, %27, %cst_17 [1, 2] : vector<1x8x128xf32> to vector<1xf32>
    %29 = vector.shape_cast %28 : vector<1xf32> to vector<1x1x1xf32>
    %30 = vector.extract %29[0, 0, 0] : f32 from vector<1x1x1xf32>
    %cst_18 = arith.constant 9.765625E-4 : f32
    %31 = arith.mulf %30, %cst_18 : f32
    %c0_i32 = arith.constant 0 : i32
    %32 = vector.broadcast %c0_i32 : i32 to vector<8x128xi32>
    %33 = arith.cmpi eq, %18, %32 : vector<8x128xi32>
    %34 = vector.broadcast %25 : f32 to vector<8x128xf32>
    %35 = arith.select %33, %34, %19 : vector<8x128xi1>, vector<8x128xf32>
    %c3_i32 = arith.constant 3 : i32
    %36 = vector.broadcast %c3_i32 : i32 to vector<8x128xi32>
    %37 = arith.cmpi eq, %18, %36 : vector<8x128xi32>
    %38 = vector.broadcast %31 : f32 to vector<8x128xf32>
    %39 = arith.select %37, %38, %35 : vector<8x128xi1>, vector<8x128xf32>
    %40 = vector.extract_strided_slice %16 {offsets = [0, 128], sizes = [8, 128], strides = [1, 1]} : vector<8x384xf32> to vector<8x128xf32>
    %41 = vector.shape_cast %40 : vector<8x128xf32> to vector<1x8x128xf32>
    %cst_19 = arith.constant dense<0.000000e+00> : vector<1xf32>
    %42 = vector.multi_reduction <add>, %41, %cst_19 [1, 2] : vector<1x8x128xf32> to vector<1xf32>
    %43 = vector.shape_cast %42 : vector<1xf32> to vector<1x1x1xf32>
    %44 = vector.extract %43[0, 0, 0] : f32 from vector<1x1x1xf32>
    %cst_20 = arith.constant 9.765625E-4 : f32
    %45 = arith.mulf %44, %cst_20 : f32
    %46 = vector.extract_strided_slice %17 {offsets = [0, 128], sizes = [8, 128], strides = [1, 1]} : vector<8x384xf32> to vector<8x128xf32>
    %47 = vector.shape_cast %46 : vector<8x128xf32> to vector<1x8x128xf32>
    %cst_21 = arith.constant dense<0.000000e+00> : vector<1xf32>
    %48 = vector.multi_reduction <add>, %47, %cst_21 [1, 2] : vector<1x8x128xf32> to vector<1xf32>
    %49 = vector.shape_cast %48 : vector<1xf32> to vector<1x1x1xf32>
    %50 = vector.extract %49[0, 0, 0] : f32 from vector<1x1x1xf32>
    %cst_22 = arith.constant 9.765625E-4 : f32
    %51 = arith.mulf %50, %cst_22 : f32
    %c1_i32 = arith.constant 1 : i32
    %52 = vector.broadcast %c1_i32 : i32 to vector<8x128xi32>
    %53 = arith.cmpi eq, %18, %52 : vector<8x128xi32>
    %54 = vector.broadcast %45 : f32 to vector<8x128xf32>
    %55 = arith.select %53, %54, %39 : vector<8x128xi1>, vector<8x128xf32>
    %c4_i32 = arith.constant 4 : i32
    %56 = vector.broadcast %c4_i32 : i32 to vector<8x128xi32>
    %57 = arith.cmpi eq, %18, %56 : vector<8x128xi32>
    %58 = vector.broadcast %51 : f32 to vector<8x128xf32>
    %59 = arith.select %57, %58, %55 : vector<8x128xi1>, vector<8x128xf32>
    %60 = vector.extract_strided_slice %16 {offsets = [0, 256], sizes = [8, 128], strides = [1, 1]} : vector<8x384xf32> to vector<8x128xf32>
    %61 = vector.shape_cast %60 : vector<8x128xf32> to vector<1x8x128xf32>
    %cst_23 = arith.constant dense<0.000000e+00> : vector<1xf32>
    %62 = vector.multi_reduction <add>, %61, %cst_23 [1, 2] : vector<1x8x128xf32> to vector<1xf32>
    %63 = vector.shape_cast %62 : vector<1xf32> to vector<1x1x1xf32>
    %64 = vector.extract %63[0, 0, 0] : f32 from vector<1x1x1xf32>
    %cst_24 = arith.constant 9.765625E-4 : f32
    %65 = arith.mulf %64, %cst_24 : f32
    %66 = vector.extract_strided_slice %17 {offsets = [0, 256], sizes = [8, 128], strides = [1, 1]} : vector<8x384xf32> to vector<8x128xf32>
    %67 = vector.shape_cast %66 : vector<8x128xf32> to vector<1x8x128xf32>
    %cst_25 = arith.constant dense<0.000000e+00> : vector<1xf32>
    %68 = vector.multi_reduction <add>, %67, %cst_25 [1, 2] : vector<1x8x128xf32> to vector<1xf32>
    %69 = vector.shape_cast %68 : vector<1xf32> to vector<1x1x1xf32>
    %70 = vector.extract %69[0, 0, 0] : f32 from vector<1x1x1xf32>
    %cst_26 = arith.constant 9.765625E-4 : f32
    %71 = arith.mulf %70, %cst_26 : f32
    %c2_i32 = arith.constant 2 : i32
    %72 = vector.broadcast %c2_i32 : i32 to vector<8x128xi32>
    %73 = arith.cmpi eq, %18, %72 : vector<8x128xi32>
    %74 = vector.broadcast %65 : f32 to vector<8x128xf32>
    %75 = arith.select %73, %74, %59 : vector<8x128xi1>, vector<8x128xf32>
    %c5_i32 = arith.constant 5 : i32
    %76 = vector.broadcast %c5_i32 : i32 to vector<8x128xi32>
    %77 = arith.cmpi eq, %18, %76 : vector<8x128xi32>
    %78 = vector.broadcast %71 : f32 to vector<8x128xf32>
    %79 = arith.select %77, %78, %75 : vector<8x128xi1>, vector<8x128xf32>
    %c0_27 = arith.constant 0 : index
    %c0_28 = arith.constant 0 : index
    %c0_29 = arith.constant 0 : index
    %80 = vector.load %arg8[%c0_27, %c0_28, %c0_29] : memref<1x8x128xf32, #tpu.memory_space<vmem>>, vector<1x8x128xf32>
    %81 = vector.shape_cast %80 : vector<1x8x128xf32> to vector<8x128xf32>
    %82 = vector.shape_cast %79 : vector<8x128xf32> to vector<1x8x128xf32>
    tpu.vector_store %arg8[%c0_27, %c0_28, %c0_29], %82 {strides = array<i32>} : memref<1x8x128xf32, #tpu.memory_space<vmem>>, vector<1x8x128xf32>,
    return
  }
  func.func @transform_0(%arg0: i32, %arg1: memref<2xi32, #tpu.memory_space<smem>>) -> (i32, i32) {
    %c0_i32 = arith.constant 0 : i32
    %c0_i32_0 = arith.constant 0 : i32
    %c0_i32_1 = arith.constant 0 : i32
    return %c0_i32, %c0_i32_0 : i32, i32
  }
  func.func @transform_1(%arg0: i32, %arg1: memref<2xi32, #tpu.memory_space<smem>>) -> (i32, i32) {
    %c0_i32 = arith.constant 0 : i32
    %c0_i32_0 = arith.constant 0 : i32
    %c0_i32_1 = arith.constant 0 : i32
    return %c0_i32, %c0_i32_0 : i32, i32
  }
  func.func @transform_2(%arg0: i32, %arg1: memref<2xi32, #tpu.memory_space<smem>>) -> (i32, i32, i32) {
    %0 = arith.index_cast %arg0 : i32 to index
    %1 = memref.load %arg1[%0] : memref<2xi32, #tpu.memory_space<smem>>
    %c0_i32 = arith.constant 0 : i32
    %c0_i32_0 = arith.constant 0 : i32
    %c0_i32_1 = arith.constant 0 : i32
    return %1, %c0_i32, %c0_i32_0 : i32, i32, i32
  }
  func.func @transform_3(%arg0: i32, %arg1: memref<2xi32, #tpu.memory_space<smem>>) -> (i32, i32, i32) {
    %0 = arith.index_cast %arg0 : i32 to index
    %1 = memref.load %arg1[%0] : memref<2xi32, #tpu.memory_space<smem>>
    %c0_i32 = arith.constant 0 : i32
    %c0_i32_0 = arith.constant 0 : i32
    %c0_i32_1 = arith.constant 0 : i32
    return %1, %c0_i32, %c0_i32_0 : i32, i32, i32
  }
  func.func @transform_4(%arg0: i32, %arg1: memref<2xi32, #tpu.memory_space<smem>>) -> (i32, i32) {
    %c0_i32 = arith.constant 0 : i32
    %c0_i32_0 = arith.constant 0 : i32
    %c0_i32_1 = arith.constant 0 : i32
    return %c0_i32, %c0_i32_0 : i32, i32
  }
  func.func @transform_5(%arg0: i32, %arg1: memref<2xi32, #tpu.memory_space<smem>>) -> (i32, i32) {
    %c0_i32 = arith.constant 0 : i32
    %c0_i32_0 = arith.constant 0 : i32
    %c0_i32_1 = arith.constant 0 : i32
    return %c0_i32, %c0_i32_0 : i32, i32
  }
  func.func @transform_6(%arg0: i32, %arg1: memref<2xi32, #tpu.memory_space<smem>>) -> (i32, i32, i32) {
    %c0_i32 = arith.constant 0 : i32
    %c0_i32_0 = arith.constant 0 : i32
    %c0_i32_1 = arith.constant 0 : i32
    return %arg0, %c0_i32, %c0_i32_0 : i32, i32, i32
  }
}

</mosaic_0001>

<llo_original>
// kernel: _run_sender_sweep.1
$region0: #{_run_sender_sweep.1}
  #allocation0 [shape = 'u32[]', space=smem, size = 0x4, offset = 0x4, fixed_abs, tag = 'smem constant byte address 0x4 - core index']
  #allocation1 [shape = 'u32[144,128]{1,0:T(1,128)}', space=vmem, size = 0x12000, scoped, tag = 'internal scratch']
  #allocation2 [shape = 's32[1]{0}', space=sflag, size = 0x4, scoped, tag = 'scoped memory for _run_sender_sweep.1']
  #allocation3 [shape = 'u8[512]{0}', space=smem, size = 0x200, scoped, tag = 'prefetched SMEM operand 0']
  %s0 = inlined_call_operand.vmem [shape: s32[2], index: 0, kind: input, shape index: {}]
  %s1 = inlined_call_operand.vmem [shape: f32[8,128], index: 1, kind: input, shape index: {}]
  %s2 = inlined_call_operand.vmem [shape: f32[8,384], index: 2, kind: input, shape index: {}]
  %s3 = inlined_call_operand.vmem [shape: f32[2,128,128], index: 3, kind: input, shape index: {}]
  %s4 = inlined_call_operand.vmem [shape: f32[2,1,128], index: 4, kind: input, shape index: {}]
  %s5 = inlined_call_operand.vmem [shape: f32[128,384], index: 5, kind: input, shape index: {}]
  %s6 = inlined_call_operand.vmem [shape: f32[1,384], index: 6, kind: input, shape index: {}]
  %s7 = inlined_call_operand.hbm [shape: f32[2,8,128], index: 7, kind: output, shape index: {}]
  %s8 = sld [smem:[#allocation0]]
  $region57: #{_run_sender_sweep.1} parent=0
    _
  %s10 = ssub.s32 1, %s8
  %s11 = scalar_select 0, %s10, %s8
  %s12 = sshll.u32 %s0, 4
  %s13 = int_to_ptr.vmem [resolvable:$true] %s12
  %15 = dma.vmem_to_smem %s13, 16, [#allocation3], [#allocation2]
  %16 = dma.done [#allocation2], 16
  %17 = sfence
  $region1: #{_run_sender_sweep.1} parent=0
    #allocation4 [shape = 'u8[8192]{0}', space=vmem, size = 0x2000, scoped, tag = 'output window, operand 0']
    #allocation5 [shape = 's32[2]{0}', space=sflag, size = 0x8, scoped, tag = 'scoped memory for _run_sender_sweep.1']
    %18 = vsyncpa [#allocation5], 0
    %s19 = scalar_lea.sflag [#allocation5], 1
    %20 = vsyncpa %s19, 0
    loop: start=0, step=1, limit=4
    $region2: #{_run_sender_sweep.1} parent=1 // loop_pre_header
      _
    $region3: #{_run_sender_sweep.1} parent=1 // loop_header
      %s22 = sphi 0, %s26
      %p23 = scmp.ge.s32.totalorder %s22, 4
      %s30 = sphi 0, %s30
      %s32 = sphi 0, %s30
      %s33 = sphi 0, %s32
      %s47 = sphi 0, %s33
      %s51 = sphi 0, %s51
      %s53 = sphi 0, %s51
      %s54 = sphi 0, %s53
      %s68 = sphi 0, %s54
      %s76 = sphi 0, %s78
      %s79 = sphi 0, %s76
      %s80 = sphi 0, %s79
      %s96 = sphi 0, %s80
      %s104 = sphi 0, %s106
      %s107 = sphi 0, %s104
      %s108 = sphi 0, %s107
      %s124 = sphi 0, %s108
      %s128 = sphi 0, %s128
      %s130 = sphi 0, %s128
      %s131 = sphi 0, %s130
      %s145 = sphi 0, %s131
      %s149 = sphi 0, %s149
      %s151 = sphi 0, %s149
      %s152 = sphi 0, %s151
      %s166 = sphi 0, %s152
      %s172 = sphi 0, %s174
      %s175 = sphi 0, %s172
      %s176 = sphi 0, %s175
      %s192 = sphi 0, %s176
    $region4: #{_run_sender_sweep.1} parent=1 // loop_header_branch
      %25 = sbr.rel (%p23) target = $region8
    $region5: #{_run_sender_sweep.1} parent=1 // loop_body
      %s27 = ssub.s32 %s22, 1
      %s28 = ssub.s32 %s22, 2
      %s29 = sadd.s32 %s22, 1
      %s31 = sadd.s32 %s30, 1
      %p34 = scmp.eq.s32.totalorder %s22, 1
      %p35 = scmp.ne.s32.totalorder %s30, %s32
      %p36 = scmp.eq.s32.totalorder %s22, 0
      %p37 = por %p35, %p36
      %p38 = scmp.ne.s32.totalorder %s30, %s32
      %p39 = scmp.eq.s32.totalorder %s27, 1
      %p40 = por %p38, %p39
      %p41 = scmp.ne.s32.totalorder %s32, %s33
      %p42 = scmp.eq.s32.totalorder %s27, 0
      %p43 = por %p41, %p42
      %p44 = scmp.ne.s32.totalorder %s32, %s33
      %p45 = scmp.eq.s32.totalorder %s28, 1
      %p46 = por %p44, %p45
      %p48 = scmp.ne.s32.totalorder %s33, %s47
      %p49 = scmp.eq.s32.totalorder %s28, 0
      %p50 = por %p48, %p49
      %s52 = sadd.s32 %s51, 1
      %p55 = scmp.eq.s32.totalorder %s22, 1
      %p56 = scmp.ne.s32.totalorder %s51, %s53
      %p57 = scmp.eq.s32.totalorder %s22, 0
      %p58 = por %p56, %p57
      %p59 = scmp.ne.s32.totalorder %s51, %s53
      %p60 = scmp.eq.s32.totalorder %s27, 1
      %p61 = por %p59, %p60
      %p62 = scmp.ne.s32.totalorder %s53, %s54
      %p63 = scmp.eq.s32.totalorder %s27, 0
      %p64 = por %p62, %p63
      %p65 = scmp.ne.s32.totalorder %s53, %s54
      %p66 = scmp.eq.s32.totalorder %s28, 1
      %p67 = por %p65, %p66
      %p69 = scmp.ne.s32.totalorder %s54, %s68
      %p70 = scmp.eq.s32.totalorder %s28, 0
      %p71 = por %p69, %p70
      %s72 = sld [smem:[#allocation3 + %s22]]
      %s73 = sld [smem:[#allocation3 + %s29]]
      %s74 = ssub.s32 %s72, %s73
      %p75 = scmp.eq.s32.totalorder %s74, 0
      %s77 = sadd.s32 %s76, 1
      %s78 = scalar_select %p75, %s76, %s77
      %p81 = pneg %p75
      %p82 = scmp.eq.s32.totalorder %s22, 1
      %p83 = por %p81, %p82
      %p84 = scmp.ne.s32.totalorder %s76, %s79
      %p85 = scmp.eq.s32.totalorder %s22, 0
      %p86 = por %p84, %p85
      %p87 = scmp.ne.s32.totalorder %s76, %s79
      %p88 = scmp.eq.s32.totalorder %s27, 1
      %p89 = por %p87, %p88
      %p90 = scmp.ne.s32.totalorder %s79, %s80
      %p91 = scmp.eq.s32.totalorder %s27, 0
      %p92 = por %p90, %p91
      %p93 = scmp.ne.s32.totalorder %s79, %s80
      %p94 = scmp.eq.s32.totalorder %s28, 1
      %p95 = por %p93, %p94
      %p97 = scmp.ne.s32.totalorder %s80, %s96
      %p98 = scmp.eq.s32.totalorder %s28, 0
      %p99 = por %p97, %p98
      %s100 = sld [smem:[#allocation3 + %s22]]
      %s101 = sld [smem:[#allocation3 + %s29]]
      %s102 = ssub.s32 %s100, %s101
      %p103 = scmp.eq.s32.totalorder %s102, 0
      %s105 = sadd.s32 %s104, 1
      %s106 = scalar_select %p103, %s104, %s105
      %p109 = pneg %p103
      %p110 = scmp.eq.s32.totalorder %s22, 1
      %p111 = por %p109, %p110
      %p112 = scmp.ne.s32.totalorder %s104, %s107
      %p113 = scmp.eq.s32.totalorder %s22, 0
      %p114 = por %p112, %p113
      %p115 = scmp.ne.s32.totalorder %s104, %s107
      %p116 = scmp.eq.s32.totalorder %s27, 1
      %p117 = por %p115, %p116
      %p118 = scmp.ne.s32.totalorder %s107, %s108
      %p119 = scmp.eq.s32.totalorder %s27, 0
      %p120 = por %p118, %p119
      %p121 = scmp.ne.s32.totalorder %s107, %s108
      %p122 = scmp.eq.s32.totalorder %s28, 1
      %p123 = por %p121, %p122
      %p125 = scmp.ne.s32.totalorder %s108, %s124
      %p126 = scmp.eq.s32.totalorder %s28, 0
      %p127 = por %p125, %p126
      %s129 = sadd.s32 %s128, 1
      %p132 = scmp.eq.s32.totalorder %s22, 1
      %p133 = scmp.ne.s32.totalorder %s128, %s130
      %p134 = scmp.eq.s32.totalorder %s22, 0
      %p135 = por %p133, %p134
      %p136 = scmp.ne.s32.totalorder %s128, %s130
      %p137 = scmp.eq.s32.totalorder %s27, 1
      %p138 = por %p136, %p137
      %p139 = scmp.ne.s32.totalorder %s130, %s131
      %p140 = scmp.eq.s32.totalorder %s27, 0
      %p141 = por %p139, %p140
      %p142 = scmp.ne.s32.totalorder %s130, %s131
      %p143 = scmp.eq.s32.totalorder %s28, 1
      %p144 = por %p142, %p143
      %p146 = scmp.ne.s32.totalorder %s131, %s145
      %p147 = scmp.eq.s32.totalorder %s28, 0
      %p148 = por %p146, %p147
      %s150 = sadd.s32 %s149, 1
      %p153 = scmp.eq.s32.totalorder %s22, 1
      %p154 = scmp.ne.s32.totalorder %s149, %s151
      %p155 = scmp.eq.s32.totalorder %s22, 0
      %p156 = por %p154, %p155
      %p157 = scmp.ne.s32.totalorder %s149, %s151
      %p158 = scmp.eq.s32.totalorder %s27, 1
      %p159 = por %p157, %p158
      %p160 = scmp.ne.s32.totalorder %s151, %s152
      %p161 = scmp.eq.s32.totalorder %s27, 0
      %p162 = por %p160, %p161
      %p163 = scmp.ne.s32.totalorder %s151, %s152
      %p164 = scmp.eq.s32.totalorder %s28, 1
      %p165 = por %p163, %p164
      %p167 = scmp.ne.s32.totalorder %s152, %s166
      %p168 = scmp.eq.s32.totalorder %s28, 0
      %p169 = por %p167, %p168
      %s170 = ssub.s32 %s22, %s29
      %p171 = scmp.eq.s32.totalorder %s170, 0
      %s173 = sadd.s32 %s172, 1
      %s174 = scalar_select %p171, %s172, %s173
      %p177 = pneg %p171
      %p178 = scmp.eq.s32.totalorder %s22, 1
      %p179 = por %p177, %p178
      %p180 = scmp.ne.s32.totalorder %s172, %s175
      %p181 = scmp.eq.s32.totalorder %s22, 0
      %p182 = por %p180, %p181
      %p183 = scmp.ne.s32.totalorder %s172, %s175
      %p184 = scmp.eq.s32.totalorder %s27, 1
      %p185 = por %p183, %p184
      %p186 = scmp.ne.s32.totalorder %s175, %s176
      %p187 = scmp.eq.s32.totalorder %s27, 0
      %p188 = por %p186, %p187
      %p189 = scmp.ne.s32.totalorder %s175, %s176
      %p190 = scmp.eq.s32.totalorder %s28, 1
      %p191 = por %p189, %p190
      %p193 = scmp.ne.s32.totalorder %s176, %s192
      %p194 = scmp.eq.s32.totalorder %s28, 0
      %p195 = por %p193, %p194
      %p196 = scmp.le.s32.totalorder 1, %s22
      %p197 = scmp.lt.s32.totalorder %s22, 3
      %p198 = pnand %p196, %p197
      %p199 = pneg %p198
      // Predicated region
      $region9: #{_run_sender_sweep.1} parent=5 // pred_check
        _
      $region10: #{_run_sender_sweep.1} parent=5 // pred_check_branch
        %201 = sbr.rel (%p198) target = $region12
      $region11: #{_run_sender_sweep.1} parent=5 // pred_region
        %s202 = ssub.s32 %s22, 1
        // Predicated region
        $region13: #{_run_sender_sweep.1} parent=11 // pred_check
          %p203 = pneg %p43
        $region14: #{_run_sender_sweep.1} parent=11 // pred_check_branch
          %205 = sbr.rel (%p203) target = $region16
        $region15: #{_run_sender_sweep.1} parent=11 // pred_region
          _
        $region16: #{_run_sender_sweep.1} parent=11 // pred_fallthru
          _
        // Predicated region
        $region17: #{_run_sender_sweep.1} parent=11 // pred_check
          %p206 = pneg %p64
        $region18: #{_run_sender_sweep.1} parent=11 // pred_check_branch
          %208 = sbr.rel (%p206) target = $region20
        $region19: #{_run_sender_sweep.1} parent=11 // pred_region
          _
        $region20: #{_run_sender_sweep.1} parent=11 // pred_fallthru
          _
        // Predicated region
        $region21: #{_run_sender_sweep.1} parent=11 // pred_check
          %p209 = pneg %p141
        $region22: #{_run_sender_sweep.1} parent=11 // pred_check_branch
          %211 = sbr.rel (%p209) target = $region24
        $region23: #{_run_sender_sweep.1} parent=11 // pred_region
          _
        $region24: #{_run_sender_sweep.1} parent=11 // pred_fallthru
          _
        // Predicated region
        $region25: #{_run_sender_sweep.1} parent=11 // pred_check
          %p212 = pneg %p162
        $region26: #{_run_sender_sweep.1} parent=11 // pred_check_branch
          %214 = sbr.rel (%p212) target = $region28
        $region27: #{_run_sender_sweep.1} parent=11 // pred_region
          _
        $region28: #{_run_sender_sweep.1} parent=11 // pred_fallthru
          _
      $region12: #{_run_sender_sweep.1} parent=5 // pred_fallthru
        _
      %p215 = scmp.lt.s32.totalorder %s22, 2
      // Predicated region
      $region29: #{_run_sender_sweep.1} parent=5 // pred_check
        %p216 = pneg %p215
      $region30: #{_run_sender_sweep.1} parent=5 // pred_check_branch
        %218 = sbr.rel (%p216) target = $region32
      $region31: #{_run_sender_sweep.1} parent=5 // pred_region
        // Predicated region
        $region33: #{_run_sender_sweep.1} parent=31 // pred_check
          %p219 = pneg %p86
        $region34: #{_run_sender_sweep.1} parent=31 // pred_check_branch
          %221 = sbr.rel (%p219) target = $region36
        $region35: #{_run_sender_sweep.1} parent=31 // pred_region
          %s222 = sld [smem:[#allocation3 + %s22]]
          %p223 = scmp.lt.s32.totalorder %s222, 1
          %s224 = scalar_select %p223, %s222, 1
          %s225 = smul.addr %s224, 16
          %s226 = smul.addr %s225, 8
          %s227 = scalar_lea.vmem %s3, %s226
          %s228 = sld [smem:[#allocation3 + %s22]]
        $region36: #{_run_sender_sweep.1} parent=31 // pred_fallthru
          _
        // Predicated region
        $region37: #{_run_sender_sweep.1} parent=31 // pred_check
          %p229 = pneg %p114
        $region38: #{_run_sender_sweep.1} parent=31 // pred_check_branch
          %231 = sbr.rel (%p229) target = $region40
        $region39: #{_run_sender_sweep.1} parent=31 // pred_region
          %s232 = sld [smem:[#allocation3 + %s22]]
          %p233 = scmp.lt.s32.totalorder %s232, 1
          %s234 = scalar_select %p233, %s232, 1
          %s235 = scalar_lea.vmem %s4, %s234
          %s236 = sld [smem:[#allocation3 + %s22]]
        $region40: #{_run_sender_sweep.1} parent=31 // pred_fallthru
          _
      $region32: #{_run_sender_sweep.1} parent=5 // pred_fallthru
        _
      %p237 = scmp.le.s32.totalorder 1, %s22
      %p238 = scmp.lt.s32.totalorder %s22, 3
      %p239 = pnand %p237, %p238
      %p240 = pneg %p239
      // Predicated region
      $region41: #{_run_sender_sweep.1} parent=5 // pred_check
        _
      $region42: #{_run_sender_sweep.1} parent=5 // pred_check_branch
        %242 = sbr.rel (%p239) target = $region44
      $region43: #{_run_sender_sweep.1} parent=5 // pred_region
        %s243 = ssub.s32 %s22, 1
        %p244 = pneg %p43
        %p245 = pneg %p40
        %p246 = pneg %p64
        %p247 = pneg %p61
        %s248 = sld [smem:[#allocation3 + %s27]]
        %p249 = scmp.lt.s32.totalorder %s248, 1
        %s250 = scalar_select %p249, %s248, 1
        %s251 = smul.addr %s250, 16
        %s252 = smul.addr %s251, 8
        %s253 = scalar_lea.vmem %s3, %s252
        %p254 = pneg %p92
        %p255 = pneg %p89
        %s256 = sld [smem:[#allocation3 + %s27]]
        %p257 = scmp.lt.s32.totalorder %s256, 1
        %s258 = scalar_select %p257, %s256, 1
        %s259 = scalar_lea.vmem %s4, %s258
        %p260 = pneg %p120
        %p261 = pneg %p117
        %p262 = pneg %p141
        %p263 = pneg %p138
        %p264 = pneg %p162
        %p265 = pneg %p159
        %p266 = pneg %p188
        %p267 = pneg %p185
        %s268 = sand.u32 %s175, 1
        %s269 = scalar_lea.sflag [#allocation5], %s268
        %s270 = sand.u32 %s175, 1
        %s271 = smul.addr %s270, 8
        %s272 = scalar_lea.vmem [#allocation4], %s271
        %s273 = sld [smem:[#allocation3 + %s27]]
        %p274 = scmp.lt.s32.totalorder %s273, 1
        %s275 = scalar_select %p274, %s273, 1
        %s276 = smul.addr %s275, 16
        %s277 = smul.addr %s276, 8
        %s278 = scalar_lea.vmem %s3, %s277
        %s279 = sld [smem:[#allocation3 + %s27]]
        %s280 = sld [smem:[#allocation3 + %s27]]
        %p281 = scmp.lt.s32.totalorder %s280, 1
        %s282 = scalar_select %p281, %s280, 1
        %s283 = scalar_lea.vmem %s4, %s282
        %s284 = sld [smem:[#allocation3 + %s27]]
        %v285 = vld [vmem:[%s1] sm:$0xff]
        %v286 = vld [vmem:[%s278] sm:$0xff]
        %v287 = vld [vmem:[%s278 + $0x8] sm:$0xff]
        %v288 = vld [vmem:[%s278 + $0x10] sm:$0xff]
        %v289 = vld [vmem:[%s278 + $0x18] sm:$0xff]
        %v290 = vld [vmem:[%s278 + $0x20] sm:$0xff]
        %v291 = vld [vmem:[%s278 + $0x28] sm:$0xff]
        %v292 = vld [vmem:[%s278 + $0x30] sm:$0xff]
        %v293 = vld [vmem:[%s278 + $0x38] sm:$0xff]
        %v294 = vld [vmem:[%s278 + $0x40] sm:$0xff]
        %v295 = vld [vmem:[%s278 + $0x48] sm:$0xff]
        %v296 = vld [vmem:[%s278 + $0x50] sm:$0xff]
        %v297 = vld [vmem:[%s278 + $0x58] sm:$0xff]
        %v298 = vld [vmem:[%s278 + $0x60] sm:$0xff]
        %v299 = vld [vmem:[%s278 + $0x68] sm:$0xff]
        %v300 = vld [vmem:[%s278 + $0x70] sm:$0xff]
        %v301 = vld [vmem:[%s278 + $0x78] sm:$0xff]
        %v302 = vld [vmem:[%s283] sm:$0x1]
        %v304 = vlaneseq
        %v305 = vshrl.u32 %v304, 7
        %v306 = vsub.s32 0, %v305
        %v307 = vrot.slane %v302, %v306
        %309 = vmatprep.subr.mxu0 0.0
        %310 = vmatpush1.msra.mxu0 %v286
        %311 = vmatprep.subr.mxu0 0.0
        %312 = vmatpush1.msra.mxu0 %v287
        %313 = vmatprep.subr.mxu0 0.0
        %314 = vmatpush1.msra.mxu0 %v288
        %315 = vmatprep.subr.mxu0 0.0
        %316 = vmatpush1.msra.mxu0 %v289
        %317 = vmatprep.subr.mxu0 0.0
        %318 = vmatpush1.msra.mxu0 %v290
        %319 = vmatprep.subr.mxu0 0.0
        %320 = vmatpush1.msra.mxu0 %v291
        %321 = vmatprep.subr.mxu0 0.0
        %322 = vmatpush1.msra.mxu0 %v292
        %323 = vmatprep.subr.mxu0 0.0
        %324 = vmatpush1.msra.mxu0 %v293
        %325 = vmatprep.subr.mxu0 0.0
        %326 = vmatpush1.msra.mxu0 %v294
        %327 = vmatprep.subr.mxu0 0.0
        %328 = vmatpush1.msra.mxu0 %v295
        %329 = vmatprep.subr.mxu0 0.0
        %330 = vmatpush1.msra.mxu0 %v296
        %331 = vmatprep.subr.mxu0 0.0
        %332 = vmatpush1.msra.mxu0 %v297
        %333 = vmatprep.subr.mxu0 0.0
        %334 = vmatpush1.msra.mxu0 %v298
        %335 = vmatprep.subr.mxu0 0.0
        %336 = vmatpush1.msra.mxu0 %v299
        %337 = vmatprep.subr.mxu0 0.0
        %338 = vmatpush1.msra.mxu0 %v300
        %339 = vmatprep.subr.mxu0 0.0
        %340 = vmatpush1.msra.mxu0 %v301
        %341 = vmatprep.subr.mxu0 0.0
        %342 = vmatpush1.msra.mxu0 0.0
        %343 = vmatprep.subr.mxu0 0.0
        %344 = vmatpush1.msra.mxu0 0.0
        %345 = vmatprep.subr.mxu0 0.0
        %346 = vmatpush1.msra.mxu0 0.0
        %347 = vmatprep.subr.mxu0 0.0
        %348 = vmatpush1.msra.mxu0 0.0
        %349 = vmatprep.subr.mxu0 0.0
        %350 = vmatpush1.msra.mxu0 0.0
        %351 = vmatprep.subr.mxu0 0.0
        %352 = vmatpush1.msra.mxu0 0.0
        %353 = vmatprep.subr.mxu0 0.0
        %354 = vmatpush1.msra.mxu0 0.0
        %355 = vmatprep.subr.mxu0 0.0
        %356 = vmatpush1.msra.mxu0 0.0
        %357 = vmatprep.subr.mxu0 0.0
        %358 = vmatpush1.msra.mxu0 0.0
        %359 = vmatprep.subr.mxu0 0.0
        %360 = vmatpush1.msra.mxu0 0.0
        %361 = vmatprep.subr.mxu0 0.0
        %362 = vmatpush1.msra.mxu0 0.0
        %363 = vmatprep.subr.mxu0 0.0
        %364 = vmatpush1.msra.mxu0 0.0
        %365 = vmatprep.subr.mxu0 0.0
        %366 = vmatpush1.msra.mxu0 0.0
        %367 = vmatprep.subr.mxu0 0.0
        %368 = vmatpush1.msra.mxu0 0.0
        %369 = vmatprep.subr.mxu0 0.0
        %370 = vmatpush1.msra.mxu0 0.0
        %371 = vmatprep.subr.mxu0 0.0
        %372 = vmatpush1.msra.mxu0 0.0
        %373 = vmatprep.mubr.f32.mxu0 0.0
        %374 = vmatmul.mubr.f32.gmra.mrb[0].mxu0 %v285
        %v375 = vpop.f32.mrb[0].mxu0
        %v376 = vadd.f32 %v307, %v375
        %v377 = vpop.f32.mrb[0].mxu0
        %378 = vdwg.mxu0
        %v379 = vtanh.pop %v376
        %v380 = vld [vmem:[%s5] sm:$0xff]
        %v381 = vld [vmem:[%s5 + $0x8] sm:$0xff]
        %v382 = vld [vmem:[%s5 + $0x10] sm:$0xff]
        %v383 = vld [vmem:[%s5 + $0x18] sm:$0xff]
        %v384 = vld [vmem:[%s5 + $0x20] sm:$0xff]
        %v385 = vld [vmem:[%s5 + $0x28] sm:$0xff]
        %v386 = vld [vmem:[%s5 + $0x30] sm:$0xff]
        %v387 = vld [vmem:[%s5 + $0x38] sm:$0xff]
        %v388 = vld [vmem:[%s5 + $0x40] sm:$0xff]
        %v389 = vld [vmem:[%s5 + $0x48] sm:$0xff]
        %v390 = vld [vmem:[%s5 + $0x50] sm:$0xff]
        %v391 = vld [vmem:[%s5 + $0x58] sm:$0xff]
        %v392 = vld [vmem:[%s5 + $0x60] sm:$0xff]
        %v393 = vld [vmem:[%s5 + $0x68] sm:$0xff]
        %v394 = vld [vmem:[%s5 + $0x70] sm:$0xff]
        %v395 = vld [vmem:[%s5 + $0x78] sm:$0xff]
        %v396 = vld [vmem:[%s5 + $0x80] sm:$0xff]
        %v397 = vld [vmem:[%s5 + $0x88] sm:$0xff]
        %v398 = vld [vmem:[%s5 + $0x90] sm:$0xff]
        %v399 = vld [vmem:[%s5 + $0x98] sm:$0xff]
        %v400 = vld [vmem:[%s5 + $0xa0] sm:$0xff]
        %v401 = vld [vmem:[%s5 + $0xa8] sm:$0xff]
        %v402 = vld [vmem:[%s5 + $0xb0] sm:$0xff]
        %v403 = vld [vmem:[%s5 + $0xb8] sm:$0xff]
        %v404 = vld [vmem:[%s5 + $0xc0] sm:$0xff]
        %v405 = vld [vmem:[%s5 + $0xc8] sm:$0xff]
        %v406 = vld [vmem:[%s5 + $0xd0] sm:$0xff]
        %v407 = vld [vmem:[%s5 + $0xd8] sm:$0xff]
        %v408 = vld [vmem:[%s5 + $0xe0] sm:$0xff]
        %v409 = vld [vmem:[%s5 + $0xe8] sm:$0xff]
        %v410 = vld [vmem:[%s5 + $0xf0] sm:$0xff]
        %v411 = vld [vmem:[%s5 + $0xf8] sm:$0xff]
        %v412 = vld [vmem:[%s5 + $0x100] sm:$0xff]
        %v413 = vld [vmem:[%s5 + $0x108] sm:$0xff]
        %v414 = vld [vmem:[%s5 + $0x110] sm:$0xff]
        %v415 = vld [vmem:[%s5 + $0x118] sm:$0xff]
        %v416 = vld [vmem:[%s5 + $0x120] sm:$0xff]
        %v417 = vld [vmem:[%s5 + $0x128] sm:$0xff]
        %v418 = vld [vmem:[%s5 + $0x130] sm:$0xff]
        %v419 = vld [vmem:[%s5 + $0x138] sm:$0xff]
        %v420 = vld [vmem:[%s5 + $0x140] sm:$0xff]
        %v421 = vld [vmem:[%s5 + $0x148] sm:$0xff]
        %v422 = vld [vmem:[%s5 + $0x150] sm:$0xff]
        %v423 = vld [vmem:[%s5 + $0x158] sm:$0xff]
        %v424 = vld [vmem:[%s5 + $0x160] sm:$0xff]
        %v425 = vld [vmem:[%s5 + $0x168] sm:$0xff]
        %v426 = vld [vmem:[%s5 + $0x170] sm:$0xff]
        %v427 = vld [vmem:[%s5 + $0x178] sm:$0xff]
        %v428 = vld [vmem:[%s6] sm:$0x7]
        %v430 = vlaneseq
        %v431 = vshrl.u32 %v430, 7
        %v432 = vsub.s32 0, %v431
        %v433 = vrot.slane %v428, %v432
        %v434 = vlaneseq
        %v435 = vshrl.u32 %v434, 7
        %v436 = vsub.s32 1, %v435
        %v437 = vrot.slane %v428, %v436
        %v438 = vlaneseq
        %v439 = vshrl.u32 %v438, 7
        %v440 = vsub.s32 2, %v439
        %v441 = vrot.slane %v428, %v440
        %445 = vmatprep.subr.mxu0 %v381
        %446 = vmatpush1.msra.mxu0 %v380
        %447 = vmatprep.subr.mxu0 %v384
        %448 = vmatpush1.msra.mxu0 %v383
        %449 = vmatprep.subr.mxu0 %v387
        %450 = vmatpush1.msra.mxu0 %v386
        %451 = vmatprep.subr.mxu0 %v390
        %452 = vmatpush1.msra.mxu0 %v389
        %453 = vmatprep.subr.mxu0 %v393
        %454 = vmatpush1.msra.mxu0 %v392
        %455 = vmatprep.subr.mxu0 %v396
        %456 = vmatpush1.msra.mxu0 %v395
        %457 = vmatprep.subr.mxu0 %v399
        %458 = vmatpush1.msra.mxu0 %v398
        %459 = vmatprep.subr.mxu0 %v402
        %460 = vmatpush1.msra.mxu0 %v401
        %461 = vmatprep.subr.mxu0 %v405
        %462 = vmatpush1.msra.mxu0 %v404
        %463 = vmatprep.subr.mxu0 %v408
        %464 = vmatpush1.msra.mxu0 %v407
        %465 = vmatprep.subr.mxu0 %v411
        %466 = vmatpush1.msra.mxu0 %v410
        %467 = vmatprep.subr.mxu0 %v414
        %468 = vmatpush1.msra.mxu0 %v413
        %469 = vmatprep.subr.mxu0 %v417
        %470 = vmatpush1.msra.mxu0 %v416
        %471 = vmatprep.subr.mxu0 %v420
        %472 = vmatpush1.msra.mxu0 %v419
        %473 = vmatprep.subr.mxu0 %v423
        %474 = vmatpush1.msra.mxu0 %v422
        %475 = vmatprep.subr.mxu0 %v426
        %476 = vmatpush1.msra.mxu0 %v425
        %477 = vmatprep.subr.mxu0 0.0
        %478 = vmatpush1.msra.mxu0 0.0
        %479 = vmatprep.subr.mxu0 0.0
        %480 = vmatpush1.msra.mxu0 0.0
        %481 = vmatprep.subr.mxu0 0.0
        %482 = vmatpush1.msra.mxu0 0.0
        %483 = vmatprep.subr.mxu0 0.0
        %484 = vmatpush1.msra.mxu0 0.0
        %485 = vmatprep.subr.mxu0 0.0
        %486 = vmatpush1.msra.mxu0 0.0
        %487 = vmatprep.subr.mxu0 0.0
        %488 = vmatpush1.msra.mxu0 0.0
        %489 = vmatprep.subr.mxu0 0.0
        %490 = vmatpush1.msra.mxu0 0.0
        %491 = vmatprep.subr.mxu0 0.0
        %492 = vmatpush1.msra.mxu0 0.0
        %493 = vmatprep.subr.mxu0 0.0
        %494 = vmatpush1.msra.mxu0 0.0
        %495 = vmatprep.subr.mxu0 0.0
        %496 = vmatpush1.msra.mxu0 0.0
        %497 = vmatprep.subr.mxu0 0.0
        %498 = vmatpush1.msra.mxu0 0.0
        %499 = vmatprep.subr.mxu0 0.0
        %500 = vmatpush1.msra.mxu0 0.0
        %501 = vmatprep.subr.mxu0 0.0
        %502 = vmatpush1.msra.mxu0 0.0
        %503 = vmatprep.subr.mxu0 0.0
        %504 = vmatpush1.msra.mxu0 0.0
        %505 = vmatprep.subr.mxu0 0.0
        %506 = vmatpush1.msra.mxu0 0.0
        %507 = vmatprep.subr.mxu0 0.0
        %508 = vmatpush1.msra.mxu0 0.0
        %509 = vmatprep.mubr.f32.mxu0 0.0
        %510 = vmatmul.mubr.f32.gmra.mrb[0].mxu0 %v379
        %v511 = vpop.f32.mrb[0].mxu0
        %v512 = vadd.f32 %v433, %v511
        %v513 = vpop.f32.mrb[0].mxu0
        %v514 = vadd.f32 %v437, %v513
        %515 = vdwg.mxu0
        %516 = vmatprep.subr.mxu0 0.0
        %517 = vmatpush1.msra.mxu0 %v382
        %518 = vmatprep.subr.mxu0 0.0
        %519 = vmatpush1.msra.mxu0 %v385
        %520 = vmatprep.subr.mxu0 0.0
        %521 = vmatpush1.msra.mxu0 %v388
        %522 = vmatprep.subr.mxu0 0.0
        %523 = vmatpush1.msra.mxu0 %v391
        %524 = vmatprep.subr.mxu0 0.0
        %525 = vmatpush1.msra.mxu0 %v394
        %526 = vmatprep.subr.mxu0 0.0
        %527 = vmatpush1.msra.mxu0 %v397
        %528 = vmatprep.subr.mxu0 0.0
        %529 = vmatpush1.msra.mxu0 %v400
        %530 = vmatprep.subr.mxu0 0.0
        %531 = vmatpush1.msra.mxu0 %v403
        %532 = vmatprep.subr.mxu0 0.0
        %533 = vmatpush1.msra.mxu0 %v406
        %534 = vmatprep.subr.mxu0 0.0
        %535 = vmatpush1.msra.mxu0 %v409
        %536 = vmatprep.subr.mxu0 0.0
        %537 = vmatpush1.msra.mxu0 %v412
        %538 = vmatprep.subr.mxu0 0.0
        %539 = vmatpush1.msra.mxu0 %v415
        %540 = vmatprep.subr.mxu0 0.0
        %541 = vmatpush1.msra.mxu0 %v418
        %542 = vmatprep.subr.mxu0 0.0
        %543 = vmatpush1.msra.mxu0 %v421
        %544 = vmatprep.subr.mxu0 0.0
        %545 = vmatpush1.msra.mxu0 %v424
        %546 = vmatprep.subr.mxu0 0.0
        %547 = vmatpush1.msra.mxu0 %v427
        %548 = vmatprep.subr.mxu0 0.0
        %549 = vmatpush1.msra.mxu0 0.0
        %550 = vmatprep.subr.mxu0 0.0
        %551 = vmatpush1.msra.mxu0 0.0
        %552 = vmatprep.subr.mxu0 0.0
        %553 = vmatpush1.msra.mxu0 0.0
        %554 = vmatprep.subr.mxu0 0.0
        %555 = vmatpush1.msra.mxu0 0.0
        %556 = vmatprep.subr.mxu0 0.0
        %557 = vmatpush1.msra.mxu0 0.0
        %558 = vmatprep.subr.mxu0 0.0
        %559 = vmatpush1.msra.mxu0 0.0
        %560 = vmatprep.subr.mxu0 0.0
        %561 = vmatpush1.msra.mxu0 0.0
        %562 = vmatprep.subr.mxu0 0.0
        %563 = vmatpush1.msra.mxu0 0.0
        %564 = vmatprep.subr.mxu0 0.0
        %565 = vmatpush1.msra.mxu0 0.0
        %566 = vmatprep.subr.mxu0 0.0
        %567 = vmatpush1.msra.mxu0 0.0
        %568 = vmatprep.subr.mxu0 0.0
        %569 = vmatpush1.msra.mxu0 0.0
        %570 = vmatprep.subr.mxu0 0.0
        %571 = vmatpush1.msra.mxu0 0.0
        %572 = vmatprep.subr.mxu0 0.0
        %573 = vmatpush1.msra.mxu0 0.0
        %574 = vmatprep.subr.mxu0 0.0
        %575 = vmatpush1.msra.mxu0 0.0
        %576 = vmatprep.subr.mxu0 0.0
        %577 = vmatpush1.msra.mxu0 0.0
        %578 = vmatprep.subr.mxu0 0.0
        %579 = vmatpush1.msra.mxu0 0.0
        %580 = vmatprep.mubr.f32.mxu0 0.0
        %581 = vmatmul.mubr.f32.gmra.mrb[0].mxu0 %v379
        %v582 = vpop.f32.mrb[0].mxu0
        %v583 = vadd.f32 %v441, %v582
        %v584 = vpop.f32.mrb[0].mxu0
        %585 = vdwg.mxu0
        %v586 = vld [vmem:[%s2] sm:$0xff]
        %v587 = vld [vmem:[%s2 + $0x8] sm:$0xff]
        %v588 = vld [vmem:[%s2 + $0x10] sm:$0xff]
        %v589 = vsub.f32 %v512, %v586
        %v590 = vsub.f32 %v514, %v587
        %v591 = vsub.f32 %v583, %v588
        %v592 = vmul.f32 %v589, %v589
        %v593 = vmul.f32 %v590, %v590
        %v594 = vmul.f32 %v591, %v591
        %v595 = vand.u32 2147483647, %v589
        %v596 = vand.u32 2147483647, %v590
        %v597 = vand.u32 2147483647, %v591
        %v598 = vlaneseq
        %v599 = vshrl.u32 %v598, 7
        %600 = vadd.xlane.f32.xlu0 %v592
        %v601 = vpop.xlane.xlu0 %600
        %v602 = vrot.slane %v601, 4
        %v603 = vadd.f32 %v601, %v602
        %v604 = vrot.slane %v603, 2
        %v605 = vadd.f32 %v603, %v604
        %v606 = vrot.slane %v605, 1
        %v607 = vadd.f32 %v605, %v606
        %s608 = vtos %v607
        %s609 = smul.f32 %s608, 0.0009765625
        %610 = vadd.xlane.f32.xlu0 %v595
        %v611 = vpop.xlane.xlu0 %610
        %v612 = vrot.slane %v611, 4
        %v613 = vadd.f32 %v611, %v612
        %v614 = vrot.slane %v613, 2
        %v615 = vadd.f32 %v613, %v614
        %v616 = vrot.slane %v615, 1
        %v617 = vadd.f32 %v615, %v616
        %s618 = vtos %v617
        %s619 = smul.f32 %s618, 0.0009765625
        %vm620 = vcmp.eq.s32.totalorder %v599, 0
        %v621 = vstv %s609
        %v622 = vsel %vm620, %v621, 0.0
        %vm623 = vcmp.eq.s32.totalorder %v599, 3
        %v624 = vstv %s619
        %v625 = vsel %vm623, %v624, %v622
        %626 = vadd.xlane.f32.xlu0 %v593
        %v627 = vpop.xlane.xlu0 %626
        %v628 = vrot.slane %v627, 4
        %v629 = vadd.f32 %v627, %v628
        %v630 = vrot.slane %v629, 2
        %v631 = vadd.f32 %v629, %v630
        %v632 = vrot.slane %v631, 1
        %v633 = vadd.f32 %v631, %v632
        %s634 = vtos %v633
        %s635 = smul.f32 %s634, 0.0009765625
        %636 = vadd.xlane.f32.xlu0 %v596
        %v637 = vpop.xlane.xlu0 %636
        %v638 = vrot.slane %v637, 4
        %v639 = vadd.f32 %v637, %v638
        %v640 = vrot.slane %v639, 2
        %v641 = vadd.f32 %v639, %v640
        %v642 = vrot.slane %v641, 1
        %v643 = vadd.f32 %v641, %v642
        %s644 = vtos %v643
        %s645 = smul.f32 %s644, 0.0009765625
        %vm646 = vcmp.eq.s32.totalorder %v599, 1
        %v647 = vstv %s635
        %v648 = vsel %vm646, %v647, %v625
        %vm649 = vcmp.eq.s32.totalorder %v599, 4
        %v650 = vstv %s645
        %v651 = vsel %vm649, %v650, %v648
        %652 = vadd.xlane.f32.xlu0 %v594
        %v653 = vpop.xlane.xlu0 %652
        %v654 = vrot.slane %v653, 4
        %v655 = vadd.f32 %v653, %v654
        %v656 = vrot.slane %v655, 2
        %v657 = vadd.f32 %v655, %v656
        %v658 = vrot.slane %v657, 1
        %v659 = vadd.f32 %v657, %v658
        %s660 = vtos %v659
        %s661 = smul.f32 %s660, 0.0009765625
        %662 = vadd.xlane.f32.xlu0 %v597
        %v663 = vpop.xlane.xlu0 %662
        %v664 = vrot.slane %v663, 4
        %v665 = vadd.f32 %v663, %v664
        %v666 = vrot.slane %v665, 2
        %v667 = vadd.f32 %v665, %v666
        %v668 = vrot.slane %v667, 1
        %v669 = vadd.f32 %v667, %v668
        %s670 = vtos %v669
        %s671 = smul.f32 %s670, 0.0009765625
        %vm672 = vcmp.eq.s32.totalorder %v599, 2
        %v673 = vstv %s661
        %v674 = vsel %vm672, %v673, %v651
        %vm675 = vcmp.eq.s32.totalorder %v599, 5
        %v676 = vstv %s671
        %v677 = vsel %vm675, %v676, %v674
        %678 = vst [vmem:[%s272] sm:$0xff] %v677
        %s679 = sand.u32 %s175, 1
        %s680 = scalar_lea.sflag [#allocation5], %s679
        %s681 = sand.u32 %s175, 1
        %s682 = smul.addr %s681, 8
        %s683 = scalar_lea.vmem [#allocation4], %s682
        // Predicated region
        $region45: #{_run_sender_sweep.1} parent=43 // pred_check
          %p684 = pneg %p185
        $region46: #{_run_sender_sweep.1} parent=43 // pred_check_branch
          %686 = sbr.rel (%p684) target = $region48
        $region47: #{_run_sender_sweep.1} parent=43 // pred_region
          %s688 = ssub.s32 128, 128
          %689 = vsyncadd %s680, %s688
          %s690 = smul.addr %s27, 128
          %s691 = scalar_lea.hbm %s7, %s690
          %s693 = sshll.u32 %s683, 4
          %s694 = int_to_ptr.vmem [resolvable:$true] %s693
          %696 = dma.vmem_to_hbm [thread:$0]  %s694, 128, %s691, %s680
        $region48: #{_run_sender_sweep.1} parent=43 // pred_fallthru
          _
      $region44: #{_run_sender_sweep.1} parent=5 // pred_fallthru
        _
      %p697 = scmp.le.s32.totalorder 2, %s22
      // Predicated region
      $region49: #{_run_sender_sweep.1} parent=5 // pred_check
        %p698 = pneg %p697
      $region50: #{_run_sender_sweep.1} parent=5 // pred_check_branch
        %700 = sbr.rel (%p698) target = $region52
      $region51: #{_run_sender_sweep.1} parent=5 // pred_region
        %s701 = ssub.s32 %s22, 2
        // Predicated region
        $region53: #{_run_sender_sweep.1} parent=51 // pred_check
          %p702 = pneg %p191
        $region54: #{_run_sender_sweep.1} parent=51 // pred_check_branch
          %704 = sbr.rel (%p702) target = $region56
        $region55: #{_run_sender_sweep.1} parent=51 // pred_region
          %s705 = sand.u32 %s176, 1
          %s706 = scalar_lea.sflag [#allocation5], %s705
          %s707 = sand.u32 %s176, 1
          %s708 = smul.addr %s707, 8
          %s709 = scalar_lea.vmem [#allocation4], %s708
          %710 = dma.done %s706, 128
        $region56: #{_run_sender_sweep.1} parent=51 // pred_fallthru
          _
      $region52: #{_run_sender_sweep.1} parent=5 // pred_fallthru
        _
    $region6: #{_run_sender_sweep.1} parent=1 // loop_footer
      %s26 = sadd.s32 1, %s22
    $region7: #{_run_sender_sweep.1} parent=1 // loop_footer_branch
      %21 = sbr.rel target = $region3
    $region8: #{_run_sender_sweep.1} parent=1 // loop_exit
      _
    %711 = vsyncpa [#allocation5], 1
    %s712 = scalar_lea.sflag [#allocation5], 1
    %713 = vsyncpa %s712, 1

</llo_original>
